<compile_context>
chip_gen: v6e
topology: v6e:2x2x1
jax: 0.10.0
libtpu: 0.0.40
codegen_flags: <defaults>
</compile_context>

<pallas_src>
import functools

import jax
import jax.numpy as jnp
from jax import lax
from jax.experimental import pallas as pl
from jax.experimental.pallas import tpu as pltpu

INPUT_DIM = 13
HIDDEN_DIM = 20

# Hardware-friendly padded dims (wrapper zero-pads; kernel strips nothing until the end).
HP = 32   # per-gate lane block: 20 -> 32; 4 gates = 128 lanes = one full vreg width
BP = 8    # batch: 4 -> 8 rows = one full sublane tile
KP = 16   # input features (K of the hoisted matmul): 13 -> 16 (sublane multiple)


def _lstm_tagger_kernel(x_ref, wih_ref, whh_ref, b_ref, out_ref, *, T, B):
    # ---- Hoisted input projection: one (T*BP, KP) @ (KP, 128) MXU matmul + one bias add.
    gx = (jnp.dot(x_ref[...], wih_ref[...], preferred_element_type=jnp.float32)
          + b_ref[...])                                    # (T*BP, 128)
    whh = whh_ref[...]                                     # (HP, 128)

    h = jnp.zeros((BP, HP), jnp.float32)
    c = jnp.zeros((BP, HP), jnp.float32)

    # Recurrence fully unrolled over the small static time axis; h/c live in vregs.
    # Each gx slice starts at a sublane-aligned offset (BP == 8) and is one (8,128) tile.
    hs = []
    for t in range(T):
        gates = gx[t * BP:(t + 1) * BP, :] + jnp.dot(
            h, whh, preferred_element_type=jnp.float32)    # (BP, 128)
        # Gate lane layout: [i: 0..32 | f: 32..64 | o: 64..96 | g: 96..128]
        sig = jax.nn.sigmoid(gates[:, :3 * HP])            # one EUP pass for i|f|o
        g_g = jnp.tanh(gates[:, 3 * HP:])                  # one EUP pass for g
        i_g = sig[:, 0 * HP:1 * HP]
        f_g = sig[:, 1 * HP:2 * HP]
        o_g = sig[:, 2 * HP:3 * HP]
        c = f_g * c + i_g * g_g
        h = o_g * jnp.tanh(c)
        hs.append(h)                                       # register-resident stash

    # ---- Deferred log_softmax over dim=1 (batch axis, matching the PyTorch module).
    # Padded batch rows (>= B) are masked out of the max and the normalizer so padding
    # cannot change the result for real rows; padded rows/lanes are stripped by the
    # wrapper after the single bulk store below.
    hall = jnp.stack(hs, axis=0)                           # (T, BP, HP)
    valid = lax.broadcasted_iota(jnp.int32, (T, BP, HP), 1) < B
    m = jnp.max(jnp.where(valid, hall, -jnp.inf), axis=1, keepdims=True)
    z = hall - m
    sum_exp = jnp.sum(jnp.where(valid, jnp.exp(z), 0.0), axis=1, keepdims=True)
    out_ref[...] = (z - jnp.log(sum_exp)).astype(out_ref.dtype)


def _gate_blocks(p):
    """Split a PyTorch-packed (4H, ...) tensor into per-gate blocks, reordered
    [i, f, g, o] (PyTorch) -> [i, f, o, g] (kernel layout)."""
    i, f, g, o = jnp.split(p, 4, axis=0)
    return (i, f, o, g)


def _pad_weight(w, in_dim, in_pad):
    """w: (4H, in_dim) PyTorch layout -> (in_pad, 4*HP), gate order [i, f, o, g], each
    gate in its own 32-lane block (real weights in its first H columns, zeros elsewhere;
    rows >= in_dim are zero)."""
    blocks = []
    for gate in _gate_blocks(w.astype(jnp.float32)):
        blk = jnp.zeros((HP, in_pad), jnp.float32).at[:HIDDEN_DIM, :in_dim].set(gate)
        blocks.append(blk)
    return jnp.concatenate(blocks, axis=0).T               # (in_pad, 4*HP)


def _pad_bias(b):
    blocks = []
    for gate in _gate_blocks(b.astype(jnp.float32)):
        blocks.append(jnp.zeros((HP,), jnp.float32).at[:HIDDEN_DIM].set(gate))
    return jnp.concatenate(blocks, axis=0).reshape(1, 4 * HP)


def lstm_tagger_forward(sentence, w_ih, w_hh, b_ih, b_hh):
    """sentence: (T, B, 13) f32 (seq-major, PyTorch nn.LSTM default).
    Weights in PyTorch layout: w_ih (4H, 13), w_hh (4H, H), b_ih/b_hh (4H,).
    Returns tag_scores: (T, B, 20) = log_softmax(lstm_out, dim=1)."""
    T, B, _ = sentence.shape
    assert B <= BP, "pad/tile the batch axis for B > 8"

    wih_p = _pad_weight(w_ih, INPUT_DIM, KP)                # (16, 128)
    whh_p = _pad_weight(w_hh, HIDDEN_DIM, HP)               # (32, 128)
    bias_p = _pad_bias(b_ih + b_hh)                         # (1, 128)

    # Pure layout padding (no compute hoisted to XLA): zero batch rows B..8 and feature
    # columns 13..16, then flatten to seq-major rows for the single hoisted matmul.
    x_p = jnp.zeros((T, BP, KP), jnp.float32).at[:, :B, :INPUT_DIM].set(
        sentence.astype(jnp.float32))
    x2d = x_p.reshape(T * BP, KP)

    kernel = functools.partial(_lstm_tagger_kernel, T=T, B=B)

    out_p = pl.pallas_call(
        kernel,
        out_shape=jax.ShapeDtypeStruct((T, BP, HP), jnp.float32),
        # Single invocation, no grid: whole problem resident in VMEM, nothing to pipeline.
        in_specs=[
            pl.BlockSpec(memory_space=pltpu.MemorySpace.VMEM),
            pl.BlockSpec(memory_space=pltpu.MemorySpace.VMEM),
            pl.BlockSpec(memory_space=pltpu.MemorySpace.VMEM),
            pl.BlockSpec(memory_space=pltpu.MemorySpace.VMEM),
        ],
        out_specs=pl.BlockSpec(memory_space=pltpu.MemorySpace.VMEM),
    )(x2d, wih_p, whh_p, bias_p)

    return out_p[:, :B, :HIDDEN_DIM]


def _reference_forward(sentence, w_ih, w_hh, b_ih, b_hh):
    """Pure-JAX reference of the PyTorch forward (PyTorch gate order), for checking."""
    T, B, _ = sentence.shape
    H = HIDDEN_DIM
    h = jnp.zeros((B, H), jnp.float32)
    c = jnp.zeros((B, H), jnp.float32)
    outs = []
    for t in range(T):
        gates = sentence[t] @ w_ih.T + h @ w_hh.T + b_ih + b_hh
        i_g = jax.nn.sigmoid(gates[:, 0 * H:1 * H])
        f_g = jax.nn.sigmoid(gates[:, 1 * H:2 * H])
        g_g = jnp.tanh(gates[:, 2 * H:3 * H])
        o_g = jax.nn.sigmoid(gates[:, 3 * H:4 * H])
        c = f_g * c + i_g * g_g
        h = o_g * jnp.tanh(c)
        outs.append(h)
    lstm_out = jnp.stack(outs, axis=0)                      # (T, B, H)
    return jax.nn.log_softmax(lstm_out, axis=1)             # dim=1 == batch axis


if __name__ == "__main__":
    T, B = 8, 4
    key = jax.random.PRNGKey(0)
    k0, k1, k2, k3, k4 = jax.random.split(key, 5)

    # PyTorch nn.LSTM init: U(-1/sqrt(H), 1/sqrt(H)) (deterministic here).
    bound = 1.0 / jnp.sqrt(jnp.float32(HIDDEN_DIM))
    w_ih = jax.random.uniform(k0, (4 * HIDDEN_DIM, INPUT_DIM), jnp.float32, -bound, bound)
    w_hh = jax.random.uniform(k1, (4 * HIDDEN_DIM, HIDDEN_DIM), jnp.float32, -bound, bound)
    b_ih = jax.random.uniform(k2, (4 * HIDDEN_DIM,), jnp.float32, -bound, bound)
    b_hh = jax.random.uniform(k3, (4 * HIDDEN_DIM,), jnp.float32, -bound, bound)

    sentence = jax.random.normal(k4, (T, B, INPUT_DIM), jnp.float32)

    out = lstm_tagger_forward(sentence, w_ih, w_hh, b_ih, b_hh)
    out = jax.block_until_ready(out)

    ref = _reference_forward(sentence, w_ih, w_hh, b_ih, b_hh)
    assert out.shape == (T, B, HIDDEN_DIM)
    assert jnp.allclose(out, ref, atol=1e-5, rtol=1e-5)

    print("KERNEL_OK")
</pallas_src>

<mosaic_0001>
module attributes {stable_mosaic.version = 11 : i64} {
  func.func @_lstm_tagger_kernel(%arg0: memref<64x16xf32, #tpu.memory_space<vmem>>, %arg1: memref<16x128xf32, #tpu.memory_space<vmem>>, %arg2: memref<32x128xf32, #tpu.memory_space<vmem>>, %arg3: memref<1x128xf32, #tpu.memory_space<vmem>>, %arg4: memref<8x8x32xf32, #tpu.memory_space<vmem>>) attributes {dimension_semantics = [], scalar_prefetch = 0 : i64, scratch_operands = 0 : i64, tpu.core_type = #tpu.core_type<tc>} {
    %c0 = arith.constant 0 : index
    %c0_0 = arith.constant 0 : index
    %0 = vector.load %arg0[%c0, %c0_0] : memref<64x16xf32, #tpu.memory_space<vmem>>, vector<64x16xf32>
    %c0_1 = arith.constant 0 : index
    %c0_2 = arith.constant 0 : index
    %1 = vector.load %arg1[%c0_1, %c0_2] : memref<16x128xf32, #tpu.memory_space<vmem>>, vector<16x128xf32>
    %cst = arith.constant dense<0.000000e+00> : vector<64x128xf32>
    %2 = tpu.matmul %0, %1, %cst {dimension_numbers = #tpu.dot_dimension_numbers<[1], [0], [0], [1], [0, 0, 1, 1], [], []>} : vector<64x16xf32>, vector<16x128xf32>, vector<64x128xf32> -> vector<64x128xf32>
    %c0_3 = arith.constant 0 : index
    %c0_4 = arith.constant 0 : index
    %3 = vector.load %arg3[%c0_3, %c0_4] : memref<1x128xf32, #tpu.memory_space<vmem>>, vector<1x128xf32>
    %4 = vector.broadcast %3 : vector<1x128xf32> to vector<64x128xf32>
    %5 = arith.addf %2, %4 : vector<64x128xf32>
    %c0_5 = arith.constant 0 : index
    %c0_6 = arith.constant 0 : index
    %6 = vector.load %arg2[%c0_5, %c0_6] : memref<32x128xf32, #tpu.memory_space<vmem>>, vector<32x128xf32>
    %cst_7 = arith.constant 0.000000e+00 : f32
    %7 = vector.broadcast %cst_7 : f32 to vector<8x32xf32>
    %cst_8 = arith.constant 0.000000e+00 : f32
    %8 = vector.broadcast %cst_8 : f32 to vector<8x32xf32>
    %9 = vector.extract_strided_slice %5 {offsets = [0, 0], sizes = [8, 128], strides = [1, 1]} : vector<64x128xf32> to vector<8x128xf32>
    %cst_9 = arith.constant dense<0.000000e+00> : vector<8x128xf32>
    %10 = tpu.matmul %7, %6, %cst_9 {dimension_numbers = #tpu.dot_dimension_numbers<[1], [0], [0], [1], [0, 0, 1, 1], [], []>} : vector<8x32xf32>, vector<32x128xf32>, vector<8x128xf32> -> vector<8x128xf32>
    %11 = arith.addf %9, %10 : vector<8x128xf32>
    %12 = vector.extract_strided_slice %11 {offsets = [0, 0], sizes = [8, 96], strides = [1, 1]} : vector<8x128xf32> to vector<8x96xf32>
    %13 = arith.negf %12 : vector<8x96xf32>
    %14 = math.exp %13 : vector<8x96xf32>
    %cst_10 = arith.constant 1.000000e+00 : f32
    %15 = vector.broadcast %cst_10 : f32 to vector<8x96xf32>
    %16 = arith.addf %15, %14 : vector<8x96xf32>
    %17 = arith.divf %15, %16 : vector<8x96xf32>
    %18 = vector.extract_strided_slice %11 {offsets = [0, 96], sizes = [8, 32], strides = [1, 1]} : vector<8x128xf32> to vector<8x32xf32>
    %19 = math.tanh %18 : vector<8x32xf32>
    %20 = vector.extract_strided_slice %17 {offsets = [0, 0], sizes = [8, 32], strides = [1, 1]} : vector<8x96xf32> to vector<8x32xf32>
    %21 = vector.extract_strided_slice %17 {offsets = [0, 32], sizes = [8, 32], strides = [1, 1]} : vector<8x96xf32> to vector<8x32xf32>
    %22 = vector.extract_strided_slice %17 {offsets = [0, 64], sizes = [8, 32], strides = [1, 1]} : vector<8x96xf32> to vector<8x32xf32>
    %23 = arith.mulf %21, %8 : vector<8x32xf32>
    %24 = arith.mulf %20, %19 : vector<8x32xf32>
    %25 = arith.addf %23, %24 : vector<8x32xf32>
    %26 = math.tanh %25 : vector<8x32xf32>
    %27 = arith.mulf %22, %26 : vector<8x32xf32>
    %28 = vector.extract_strided_slice %5 {offsets = [8, 0], sizes = [8, 128], strides = [1, 1]} : vector<64x128xf32> to vector<8x128xf32>
    %cst_11 = arith.constant dense<0.000000e+00> : vector<8x128xf32>
    %29 = tpu.matmul %27, %6, %cst_11 {dimension_numbers = #tpu.dot_dimension_numbers<[1], [0], [0], [1], [0, 0, 1, 1], [], []>} : vector<8x32xf32>, vector<32x128xf32>, vector<8x128xf32> -> vector<8x128xf32>
    %30 = arith.addf %28, %29 : vector<8x128xf32>
    %31 = vector.extract_strided_slice %30 {offsets = [0, 0], sizes = [8, 96], strides = [1, 1]} : vector<8x128xf32> to vector<8x96xf32>
    %32 = arith.negf %31 : vector<8x96xf32>
    %33 = math.exp %32 : vector<8x96xf32>
    %cst_12 = arith.constant 1.000000e+00 : f32
    %34 = vector.broadcast %cst_12 : f32 to vector<8x96xf32>
    %35 = arith.addf %34, %33 : vector<8x96xf32>
    %36 = arith.divf %34, %35 : vector<8x96xf32>
    %37 = vector.extract_strided_slice %30 {offsets = [0, 96], sizes = [8, 32], strides = [1, 1]} : vector<8x128xf32> to vector<8x32xf32>
    %38 = math.tanh %37 : vector<8x32xf32>
    %39 = vector.extract_strided_slice %36 {offsets = [0, 0], sizes = [8, 32], strides = [1, 1]} : vector<8x96xf32> to vector<8x32xf32>
    %40 = vector.extract_strided_slice %36 {offsets = [0, 32], sizes = [8, 32], strides = [1, 1]} : vector<8x96xf32> to vector<8x32xf32>
    %41 = vector.extract_strided_slice %36 {offsets = [0, 64], sizes = [8, 32], strides = [1, 1]} : vector<8x96xf32> to vector<8x32xf32>
    %42 = arith.mulf %40, %25 : vector<8x32xf32>
    %43 = arith.mulf %39, %38 : vector<8x32xf32>
    %44 = arith.addf %42, %43 : vector<8x32xf32>
    %45 = math.tanh %44 : vector<8x32xf32>
    %46 = arith.mulf %41, %45 : vector<8x32xf32>
    %47 = vector.extract_strided_slice %5 {offsets = [16, 0], sizes = [8, 128], strides = [1, 1]} : vector<64x128xf32> to vector<8x128xf32>
    %cst_13 = arith.constant dense<0.000000e+00> : vector<8x128xf32>
    %48 = tpu.matmul %46, %6, %cst_13 {dimension_numbers = #tpu.dot_dimension_numbers<[1], [0], [0], [1], [0, 0, 1, 1], [], []>} : vector<8x32xf32>, vector<32x128xf32>, vector<8x128xf32> -> vector<8x128xf32>
    %49 = arith.addf %47, %48 : vector<8x128xf32>
    %50 = vector.extract_strided_slice %49 {offsets = [0, 0], sizes = [8, 96], strides = [1, 1]} : vector<8x128xf32> to vector<8x96xf32>
    %51 = arith.negf %50 : vector<8x96xf32>
    %52 = math.exp %51 : vector<8x96xf32>
    %cst_14 = arith.constant 1.000000e+00 : f32
    %53 = vector.broadcast %cst_14 : f32 to vector<8x96xf32>
    %54 = arith.addf %53, %52 : vector<8x96xf32>
    %55 = arith.divf %53, %54 : vector<8x96xf32>
    %56 = vector.extract_strided_slice %49 {offsets = [0, 96], sizes = [8, 32], strides = [1, 1]} : vector<8x128xf32> to vector<8x32xf32>
    %57 = math.tanh %56 : vector<8x32xf32>
    %58 = vector.extract_strided_slice %55 {offsets = [0, 0], sizes = [8, 32], strides = [1, 1]} : vector<8x96xf32> to vector<8x32xf32>
    %59 = vector.extract_strided_slice %55 {offsets = [0, 32], sizes = [8, 32], strides = [1, 1]} : vector<8x96xf32> to vector<8x32xf32>
    %60 = vector.extract_strided_slice %55 {offsets = [0, 64], sizes = [8, 32], strides = [1, 1]} : vector<8x96xf32> to vector<8x32xf32>
    %61 = arith.mulf %59, %44 : vector<8x32xf32>
    %62 = arith.mulf %58, %57 : vector<8x32xf32>
    %63 = arith.addf %61, %62 : vector<8x32xf32>
    %64 = math.tanh %63 : vector<8x32xf32>
    %65 = arith.mulf %60, %64 : vector<8x32xf32>
    %66 = vector.extract_strided_slice %5 {offsets = [24, 0], sizes = [8, 128], strides = [1, 1]} : vector<64x128xf32> to vector<8x128xf32>
    %cst_15 = arith.constant dense<0.000000e+00> : vector<8x128xf32>
    %67 = tpu.matmul %65, %6, %cst_15 {dimension_numbers = #tpu.dot_dimension_numbers<[1], [0], [0], [1], [0, 0, 1, 1], [], []>} : vector<8x32xf32>, vector<32x128xf32>, vector<8x128xf32> -> vector<8x128xf32>
    %68 = arith.addf %66, %67 : vector<8x128xf32>
    %69 = vector.extract_strided_slice %68 {offsets = [0, 0], sizes = [8, 96], strides = [1, 1]} : vector<8x128xf32> to vector<8x96xf32>
    %70 = arith.negf %69 : vector<8x96xf32>
    %71 = math.exp %70 : vector<8x96xf32>
    %cst_16 = arith.constant 1.000000e+00 : f32
    %72 = vector.broadcast %cst_16 : f32 to vector<8x96xf32>
    %73 = arith.addf %72, %71 : vector<8x96xf32>
    %74 = arith.divf %72, %73 : vector<8x96xf32>
    %75 = vector.extract_strided_slice %68 {offsets = [0, 96], sizes = [8, 32], strides = [1, 1]} : vector<8x128xf32> to vector<8x32xf32>
    %76 = math.tanh %75 : vector<8x32xf32>
    %77 = vector.extract_strided_slice %74 {offsets = [0, 0], sizes = [8, 32], strides = [1, 1]} : vector<8x96xf32> to vector<8x32xf32>
    %78 = vector.extract_strided_slice %74 {offsets = [0, 32], sizes = [8, 32], strides = [1, 1]} : vector<8x96xf32> to vector<8x32xf32>
    %79 = vector.extract_strided_slice %74 {offsets = [0, 64], sizes = [8, 32], strides = [1, 1]} : vector<8x96xf32> to vector<8x32xf32>
    %80 = arith.mulf %78, %63 : vector<8x32xf32>
    %81 = arith.mulf %77, %76 : vector<8x32xf32>
    %82 = arith.addf %80, %81 : vector<8x32xf32>
    %83 = math.tanh %82 : vector<8x32xf32>
    %84 = arith.mulf %79, %83 : vector<8x32xf32>
    %85 = vector.extract_strided_slice %5 {offsets = [32, 0], sizes = [8, 128], strides = [1, 1]} : vector<64x128xf32> to vector<8x128xf32>
    %cst_17 = arith.constant dense<0.000000e+00> : vector<8x128xf32>
    %86 = tpu.matmul %84, %6, %cst_17 {dimension_numbers = #tpu.dot_dimension_numbers<[1], [0], [0], [1], [0, 0, 1, 1], [], []>} : vector<8x32xf32>, vector<32x128xf32>, vector<8x128xf32> -> vector<8x128xf32>
    %87 = arith.addf %85, %86 : vector<8x128xf32>
    %88 = vector.extract_strided_slice %87 {offsets = [0, 0], sizes = [8, 96], strides = [1, 1]} : vector<8x128xf32> to vector<8x96xf32>
    %89 = arith.negf %88 : vector<8x96xf32>
    %90 = math.exp %89 : vector<8x96xf32>
    %cst_18 = arith.constant 1.000000e+00 : f32
    %91 = vector.broadcast %cst_18 : f32 to vector<8x96xf32>
    %92 = arith.addf %91, %90 : vector<8x96xf32>
    %93 = arith.divf %91, %92 : vector<8x96xf32>
    %94 = vector.extract_strided_slice %87 {offsets = [0, 96], sizes = [8, 32], strides = [1, 1]} : vector<8x128xf32> to vector<8x32xf32>
    %95 = math.tanh %94 : vector<8x32xf32>
    %96 = vector.extract_strided_slice %93 {offsets = [0, 0], sizes = [8, 32], strides = [1, 1]} : vector<8x96xf32> to vector<8x32xf32>
    %97 = vector.extract_strided_slice %93 {offsets = [0, 32], sizes = [8, 32], strides = [1, 1]} : vector<8x96xf32> to vector<8x32xf32>
    %98 = vector.extract_strided_slice %93 {offsets = [0, 64], sizes = [8, 32], strides = [1, 1]} : vector<8x96xf32> to vector<8x32xf32>
    %99 = arith.mulf %97, %82 : vector<8x32xf32>
    %100 = arith.mulf %96, %95 : vector<8x32xf32>
    %101 = arith.addf %99, %100 : vector<8x32xf32>
    %102 = math.tanh %101 : vector<8x32xf32>
    %103 = arith.mulf %98, %102 : vector<8x32xf32>
    %104 = vector.extract_strided_slice %5 {offsets = [40, 0], sizes = [8, 128], strides = [1, 1]} : vector<64x128xf32> to vector<8x128xf32>
    %cst_19 = arith.constant dense<0.000000e+00> : vector<8x128xf32>
    %105 = tpu.matmul %103, %6, %cst_19 {dimension_numbers = #tpu.dot_dimension_numbers<[1], [0], [0], [1], [0, 0, 1, 1], [], []>} : vector<8x32xf32>, vector<32x128xf32>, vector<8x128xf32> -> vector<8x128xf32>
    %106 = arith.addf %104, %105 : vector<8x128xf32>
    %107 = vector.extract_strided_slice %106 {offsets = [0, 0], sizes = [8, 96], strides = [1, 1]} : vector<8x128xf32> to vector<8x96xf32>
    %108 = arith.negf %107 : vector<8x96xf32>
    %109 = math.exp %108 : vector<8x96xf32>
    %cst_20 = arith.constant 1.000000e+00 : f32
    %110 = vector.broadcast %cst_20 : f32 to vector<8x96xf32>
    %111 = arith.addf %110, %109 : vector<8x96xf32>
    %112 = arith.divf %110, %111 : vector<8x96xf32>
    %113 = vector.extract_strided_slice %106 {offsets = [0, 96], sizes = [8, 32], strides = [1, 1]} : vector<8x128xf32> to vector<8x32xf32>
    %114 = math.tanh %113 : vector<8x32xf32>
    %115 = vector.extract_strided_slice %112 {offsets = [0, 0], sizes = [8, 32], strides = [1, 1]} : vector<8x96xf32> to vector<8x32xf32>
    %116 = vector.extract_strided_slice %112 {offsets = [0, 32], sizes = [8, 32], strides = [1, 1]} : vector<8x96xf32> to vector<8x32xf32>
    %117 = vector.extract_strided_slice %112 {offsets = [0, 64], sizes = [8, 32], strides = [1, 1]} : vector<8x96xf32> to vector<8x32xf32>
    %118 = arith.mulf %116, %101 : vector<8x32xf32>
    %119 = arith.mulf %115, %114 : vector<8x32xf32>
    %120 = arith.addf %118, %119 : vector<8x32xf32>
    %121 = math.tanh %120 : vector<8x32xf32>
    %122 = arith.mulf %117, %121 : vector<8x32xf32>
    %123 = vector.extract_strided_slice %5 {offsets = [48, 0], sizes = [8, 128], strides = [1, 1]} : vector<64x128xf32> to vector<8x128xf32>
    %cst_21 = arith.constant dense<0.000000e+00> : vector<8x128xf32>
    %124 = tpu.matmul %122, %6, %cst_21 {dimension_numbers = #tpu.dot_dimension_numbers<[1], [0], [0], [1], [0, 0, 1, 1], [], []>} : vector<8x32xf32>, vector<32x128xf32>, vector<8x128xf32> -> vector<8x128xf32>
    %125 = arith.addf %123, %124 : vector<8x128xf32>
    %126 = vector.extract_strided_slice %125 {offsets = [0, 0], sizes = [8, 96], strides = [1, 1]} : vector<8x128xf32> to vector<8x96xf32>
    %127 = arith.negf %126 : vector<8x96xf32>
    %128 = math.exp %127 : vector<8x96xf32>
    %cst_22 = arith.constant 1.000000e+00 : f32
    %129 = vector.broadcast %cst_22 : f32 to vector<8x96xf32>
    %130 = arith.addf %129, %128 : vector<8x96xf32>
    %131 = arith.divf %129, %130 : vector<8x96xf32>
    %132 = vector.extract_strided_slice %125 {offsets = [0, 96], sizes = [8, 32], strides = [1, 1]} : vector<8x128xf32> to vector<8x32xf32>
    %133 = math.tanh %132 : vector<8x32xf32>
    %134 = vector.extract_strided_slice %131 {offsets = [0, 0], sizes = [8, 32], strides = [1, 1]} : vector<8x96xf32> to vector<8x32xf32>
    %135 = vector.extract_strided_slice %131 {offsets = [0, 32], sizes = [8, 32], strides = [1, 1]} : vector<8x96xf32> to vector<8x32xf32>
    %136 = vector.extract_strided_slice %131 {offsets = [0, 64], sizes = [8, 32], strides = [1, 1]} : vector<8x96xf32> to vector<8x32xf32>
    %137 = arith.mulf %135, %120 : vector<8x32xf32>
    %138 = arith.mulf %134, %133 : vector<8x32xf32>
    %139 = arith.addf %137, %138 : vector<8x32xf32>
    %140 = math.tanh %139 : vector<8x32xf32>
    %141 = arith.mulf %136, %140 : vector<8x32xf32>
    %142 = vector.extract_strided_slice %5 {offsets = [56, 0], sizes = [8, 128], strides = [1, 1]} : vector<64x128xf32> to vector<8x128xf32>
    %cst_23 = arith.constant dense<0.000000e+00> : vector<8x128xf32>
    %143 = tpu.matmul %141, %6, %cst_23 {dimension_numbers = #tpu.dot_dimension_numbers<[1], [0], [0], [1], [0, 0, 1, 1], [], []>} : vector<8x32xf32>, vector<32x128xf32>, vector<8x128xf32> -> vector<8x128xf32>
    %144 = arith.addf %142, %143 : vector<8x128xf32>
    %145 = vector.extract_strided_slice %144 {offsets = [0, 0], sizes = [8, 96], strides = [1, 1]} : vector<8x128xf32> to vector<8x96xf32>
    %146 = arith.negf %145 : vector<8x96xf32>
    %147 = math.exp %146 : vector<8x96xf32>
    %cst_24 = arith.constant 1.000000e+00 : f32
    %148 = vector.broadcast %cst_24 : f32 to vector<8x96xf32>
    %149 = arith.addf %148, %147 : vector<8x96xf32>
    %150 = arith.divf %148, %149 : vector<8x96xf32>
    %151 = vector.extract_strided_slice %144 {offsets = [0, 96], sizes = [8, 32], strides = [1, 1]} : vector<8x128xf32> to vector<8x32xf32>
    %152 = math.tanh %151 : vector<8x32xf32>
    %153 = vector.extract_strided_slice %150 {offsets = [0, 0], sizes = [8, 32], strides = [1, 1]} : vector<8x96xf32> to vector<8x32xf32>
    %154 = vector.extract_strided_slice %150 {offsets = [0, 32], sizes = [8, 32], strides = [1, 1]} : vector<8x96xf32> to vector<8x32xf32>
    %155 = vector.extract_strided_slice %150 {offsets = [0, 64], sizes = [8, 32], strides = [1, 1]} : vector<8x96xf32> to vector<8x32xf32>
    %156 = arith.mulf %154, %139 : vector<8x32xf32>
    %157 = arith.mulf %153, %152 : vector<8x32xf32>
    %158 = arith.addf %156, %157 : vector<8x32xf32>
    %159 = math.tanh %158 : vector<8x32xf32>
    %160 = arith.mulf %155, %159 : vector<8x32xf32>
    %161 = vector.shape_cast %27 : vector<8x32xf32> to vector<1x8x32xf32>
    %162 = vector.shape_cast %46 : vector<8x32xf32> to vector<1x8x32xf32>
    %163 = vector.shape_cast %65 : vector<8x32xf32> to vector<1x8x32xf32>
    %164 = vector.shape_cast %84 : vector<8x32xf32> to vector<1x8x32xf32>
    %165 = vector.shape_cast %103 : vector<8x32xf32> to vector<1x8x32xf32>
    %166 = vector.shape_cast %122 : vector<8x32xf32> to vector<1x8x32xf32>
    %167 = vector.shape_cast %141 : vector<8x32xf32> to vector<1x8x32xf32>
    %168 = vector.shape_cast %160 : vector<8x32xf32> to vector<1x8x32xf32>
    %169 = tpu.concatenate %161, %162, %163, %164, %165, %166, %167, %168 in 0 : vector<1x8x32xf32>, vector<1x8x32xf32>, vector<1x8x32xf32>, vector<1x8x32xf32>, vector<1x8x32xf32>, vector<1x8x32xf32>, vector<1x8x32xf32>, vector<1x8x32xf32> -> vector<8x8x32xf32>
    %170 = tpu.iota {dimensions = array<i32: 1>} : vector<8x8x32xi32>
    %c4_i32 = arith.constant 4 : i32
    %171 = vector.broadcast %c4_i32 : i32 to vector<8x8x32xi32>
    %172 = arith.cmpi slt, %170, %171 : vector<8x8x32xi32>
    %cst_25 = arith.constant 0xFF800000 : f32
    %173 = vector.broadcast %cst_25 : f32 to vector<8x8x32xf32>
    %174 = arith.select %172, %169, %173 : vector<8x8x32xi1>, vector<8x8x32xf32>
    %cst_26 = arith.constant dense<0xFF800000> : vector<8x32xf32>
    %175 = vector.multi_reduction <maximumf>, %174, %cst_26 [1] : vector<8x8x32xf32> to vector<8x32xf32>
    %176 = vector.shape_cast %175 : vector<8x32xf32> to vector<8x1x32xf32>
    %177 = vector.broadcast %176 : vector<8x1x32xf32> to vector<8x8x32xf32>
    %178 = arith.subf %169, %177 : vector<8x8x32xf32>
    %179 = math.exp %178 : vector<8x8x32xf32>
    %cst_27 = arith.constant 0.000000e+00 : f32
    %180 = vector.broadcast %cst_27 : f32 to vector<8x8x32xf32>
    %181 = arith.select %172, %179, %180 : vector<8x8x32xi1>, vector<8x8x32xf32>
    %cst_28 = arith.constant dense<0.000000e+00> : vector<8x32xf32>
    %182 = vector.multi_reduction <add>, %181, %cst_28 [1] : vector<8x8x32xf32> to vector<8x32xf32>
    %183 = vector.shape_cast %182 : vector<8x32xf32> to vector<8x1x32xf32>
    %184 = math.log %183 : vector<8x1x32xf32>
    %185 = vector.broadcast %184 : vector<8x1x32xf32> to vector<8x8x32xf32>
    %186 = arith.subf %178, %185 : vector<8x8x32xf32>
    %c0_29 = arith.constant 0 : index
    %c0_30 = arith.constant 0 : index
    %c0_31 = arith.constant 0 : index
    %187 = vector.load %arg4[%c0_29, %c0_30, %c0_31] : memref<8x8x32xf32, #tpu.memory_space<vmem>>, vector<8x8x32xf32>
    tpu.vector_store %arg4[%c0_29, %c0_30, %c0_31], %186 {strides = array<i32>} : memref<8x8x32xf32, #tpu.memory_space<vmem>>, vector<8x8x32xf32>,
    return
  }
}

</mosaic_0001>

<llo_original>
// kernel: tpu_custom_call.1
$region0: #{tpu_custom_call.1}
  #allocation0 [shape = 'u32[]', space=smem, size = 0x4, offset = 0x4, fixed_abs, tag = 'smem constant byte address 0x4 - core index']
  #allocation1 [shape = 'u32[144,128]{1,0:T(1,128)}', space=vmem, size = 0x12000, scoped, tag = 'internal scratch']
  %s0 = inlined_call_operand.vmem [shape: f32[64,16], index: 0, kind: input, shape index: {}]
  %s1 = inlined_call_operand.vmem [shape: f32[16,128], index: 1, kind: input, shape index: {}]
  %s2 = inlined_call_operand.vmem [shape: f32[32,128], index: 2, kind: input, shape index: {}]
  %s3 = inlined_call_operand.vmem [shape: f32[1,128], index: 3, kind: input, shape index: {}]
  %s4 = inlined_call_operand.hbm [shape: f32[8,8,32], index: 4, kind: output, shape index: {}]
  %s5 = sld [smem:[#allocation0]]
  $region26: #{tpu_custom_call.1} parent=0
    _
  %s7 = ssub.s32 1, %s5
  %s8 = scalar_select 0, %s7, %s5
  $region1: #{tpu_custom_call.1} parent=0
    #allocation2 [shape = 'u8[32768]{0}', space=vmem, size = 0x8000, scoped, tag = 'output window, operand 0, single buffered']
    #allocation3 [shape = 's32[1]{0}', space=sflag, size = 0x4, scoped, tag = 'scoped memory for tpu_custom_call.1']
    %9 = vsyncpa [#allocation3], 0
    // Predicated region
    $region2: #{tpu_custom_call.1} parent=1 // pred_check
      _
    $region3: #{tpu_custom_call.1} parent=1 // pred_check_branch
      %11 = sbr.rel (0) target = $region5
    $region4: #{tpu_custom_call.1} parent=1 // pred_region
      _
    $region5: #{tpu_custom_call.1} parent=1 // pred_fallthru
      _
    // Predicated region
    $region6: #{tpu_custom_call.1} parent=1 // pred_check
      _
    $region7: #{tpu_custom_call.1} parent=1 // pred_check_branch
      %13 = sbr.rel (0) target = $region9
    $region8: #{tpu_custom_call.1} parent=1 // pred_region
      _
    $region9: #{tpu_custom_call.1} parent=1 // pred_fallthru
      _
    // Predicated region
    $region10: #{tpu_custom_call.1} parent=1 // pred_check
      _
    $region11: #{tpu_custom_call.1} parent=1 // pred_check_branch
      %15 = sbr.rel (0) target = $region13
    $region12: #{tpu_custom_call.1} parent=1 // pred_region
      _
    $region13: #{tpu_custom_call.1} parent=1 // pred_fallthru
      _
    // Predicated region
    $region14: #{tpu_custom_call.1} parent=1 // pred_check
      _
    $region15: #{tpu_custom_call.1} parent=1 // pred_check_branch
      %17 = sbr.rel (0) target = $region17
    $region16: #{tpu_custom_call.1} parent=1 // pred_region
      _
    $region17: #{tpu_custom_call.1} parent=1 // pred_fallthru
      _
    %v18 = vld [vmem:[%s0] sm:$0xff]
    %v19 = vld [vmem:[%s0 + $0x8] sm:$0xff]
    %v20 = vld [vmem:[%s0 + $0x10] sm:$0xff]
    %v21 = vld [vmem:[%s0 + $0x18] sm:$0xff]
    %v22 = vld [vmem:[%s0 + $0x20] sm:$0xff]
    %v23 = vld [vmem:[%s0 + $0x28] sm:$0xff]
    %v24 = vld [vmem:[%s0 + $0x30] sm:$0xff]
    %v25 = vld [vmem:[%s0 + $0x38] sm:$0xff]
    %v26 = vld [vmem:[%s1] sm:$0xff]
    %v27 = vld [vmem:[%s1 + $0x8] sm:$0xff]
    %v28 = vld [vmem:[%s3] sm:$0x1]
    %v30 = vlaneseq
    %v31 = vshrl.u32 %v30, 7
    %v32 = vsub.s32 0, %v31
    %v33 = vrot.slane %v28, %v32
    %vm35 = vcmask 130048
    %v37 = vsel %vm35, %v18, 0
    %v40 = vsel %vm35, %v19, 0
    %v43 = vsel %vm35, %v20, 0
    %v46 = vsel %vm35, %v21, 0
    %v49 = vsel %vm35, %v22, 0
    %v52 = vsel %vm35, %v23, 0
    %v55 = vsel %vm35, %v24, 0
    %v58 = vsel %vm35, %v25, 0
    %60 = vmatprep.subr.mxu0 0.0
    %61 = vmatpush1.msra.mxu0 0.0
    %62 = vmatprep.subr.mxu0 0.0
    %63 = vmatpush1.msra.mxu0 0.0
    %64 = vmatprep.subr.mxu0 0.0
    %65 = vmatpush1.msra.mxu0 0.0
    %66 = vmatprep.subr.mxu0 0.0
    %67 = vmatpush1.msra.mxu0 0.0
    %68 = vmatprep.subr.mxu0 0.0
    %69 = vmatpush1.msra.mxu0 0.0
    %70 = vmatprep.subr.mxu0 0.0
    %71 = vmatpush1.msra.mxu0 0.0
    %72 = vmatprep.subr.mxu0 0.0
    %73 = vmatpush1.msra.mxu0 0.0
    %74 = vmatprep.subr.mxu0 0.0
    %75 = vmatpush1.msra.mxu0 0.0
    %76 = vmatprep.subr.mxu0 0.0
    %77 = vmatpush1.msra.mxu0 0.0
    %78 = vmatprep.subr.mxu0 0.0
    %79 = vmatpush1.msra.mxu0 0.0
    %80 = vmatprep.subr.mxu0 0.0
    %81 = vmatpush1.msra.mxu0 0.0
    %82 = vmatprep.subr.mxu0 0.0
    %83 = vmatpush1.msra.mxu0 0.0
    %84 = vmatprep.subr.mxu0 0.0
    %85 = vmatpush1.msra.mxu0 0.0
    %86 = vmatprep.subr.mxu0 0.0
    %87 = vmatpush1.msra.mxu0 0.0
    %88 = vmatprep.subr.mxu0 0.0
    %89 = vmatpush1.msra.mxu0 %v27
    %90 = vmatprep.subr.mxu0 0.0
    %91 = vmatpush1.msra.mxu0 %v26
    %92 = vmatprep.subr.mxu0 0.0
    %93 = vmatpush2.msra.mxu0 0.0
    %94 = vmatprep.subr.mxu0 0.0
    %95 = vmatpush2.msra.mxu0 0.0
    %96 = vmatprep.subr.mxu0 0.0
    %97 = vmatpush2.msra.mxu0 0.0
    %98 = vmatprep.subr.mxu0 0.0
    %99 = vmatpush2.msra.mxu0 0.0
    %100 = vmatprep.subr.mxu0 0.0
    %101 = vmatpush2.msra.mxu0 0.0
    %102 = vmatprep.subr.mxu0 0.0
    %103 = vmatpush2.msra.mxu0 0.0
    %104 = vmatprep.subr.mxu0 0.0
    %105 = vmatpush2.msra.mxu0 0.0
    %106 = vmatprep.subr.mxu0 0.0
    %107 = vmatpush2.msra.mxu0 0.0
    %108 = vmatprep.subr.mxu0 0.0
    %109 = vmatpush2.msra.mxu0 0.0
    %110 = vmatprep.subr.mxu0 0.0
    %111 = vmatpush2.msra.mxu0 0.0
    %112 = vmatprep.subr.mxu0 0.0
    %113 = vmatpush2.msra.mxu0 0.0
    %114 = vmatprep.subr.mxu0 0.0
    %115 = vmatpush2.msra.mxu0 0.0
    %116 = vmatprep.subr.mxu0 0.0
    %117 = vmatpush2.msra.mxu0 0.0
    %118 = vmatprep.subr.mxu0 0.0
    %119 = vmatpush2.msra.mxu0 0.0
    %120 = vmatprep.subr.mxu0 0.0
    %121 = vmatpush2.msra.mxu0 0.0
    %122 = vmatprep.subr.mxu0 0.0
    %123 = vmatpush2.msra.mxu0 0.0
    %124 = vmatprep.mubr.f32.mxu0 0.0
    %125 = vmatmul.mubr.f32.gmra.mxu0 %v37
    %v126 = vpop.f32.mrf.mxu0
    %v127 = vadd.f32 %v33, %v126
    %v128 = vpop.f32.mrf.mxu0
    %129 = vmatprep.mubr.f32.mxu0 0.0
    %130 = vmatmul.mubr.f32.gmra.mxu0 %v40
    %v131 = vpop.f32.mrf.mxu0
    %v132 = vadd.f32 %v33, %v131
    %v133 = vpop.f32.mrf.mxu0
    %134 = vmatprep.mubr.f32.mxu0 0.0
    %135 = vmatmul.mubr.f32.gmra.mxu0 %v43
    %v136 = vpop.f32.mrf.mxu0
    %v137 = vadd.f32 %v33, %v136
    %v138 = vpop.f32.mrf.mxu0
    %139 = vmatprep.mubr.f32.mxu0 0.0
    %140 = vmatmul.mubr.f32.gmra.mxu0 %v46
    %v141 = vpop.f32.mrf.mxu0
    %v142 = vadd.f32 %v33, %v141
    %v143 = vpop.f32.mrf.mxu0
    %144 = vmatprep.mubr.f32.mxu0 0.0
    %145 = vmatmul.mubr.f32.gmra.mxu0 %v49
    %v146 = vpop.f32.mrf.mxu0
    %v147 = vadd.f32 %v33, %v146
    %v148 = vpop.f32.mrf.mxu0
    %149 = vmatprep.mubr.f32.mxu0 0.0
    %150 = vmatmul.mubr.f32.gmra.mxu0 %v52
    %v151 = vpop.f32.mrf.mxu0
    %v152 = vadd.f32 %v33, %v151
    %v153 = vpop.f32.mrf.mxu0
    %154 = vmatprep.mubr.f32.mxu0 0.0
    %155 = vmatmul.mubr.f32.gmra.mxu0 %v55
    %v156 = vpop.f32.mrf.mxu0
    %v157 = vadd.f32 %v33, %v156
    %v158 = vpop.f32.mrf.mxu0
    %159 = vmatprep.mubr.f32.mxu0 0.0
    %160 = vmatmul.mubr.f32.gmra.mxu0 %v58
    %v161 = vpop.f32.mrf.mxu0
    %v162 = vadd.f32 %v33, %v161
    %v163 = vpop.f32.mrf.mxu0
    %164 = vdwg.mxu0
    %v165 = vld [vmem:[%s2] sm:$0xff]
    %v166 = vld [vmem:[%s2 + $0x8] sm:$0xff]
    %v167 = vld [vmem:[%s2 + $0x10] sm:$0xff]
    %v168 = vld [vmem:[%s2 + $0x18] sm:$0xff]
    %vm169 = vcmask 261120
    %v171 = vsel %vm169, 0.0, 0
    %173 = vmatprep.subr.mxu0 0.0
    %174 = vmatpush1.msra.mxu0 0.0
    %175 = vmatprep.subr.mxu0 0.0
    %176 = vmatpush1.msra.mxu0 0.0
    %177 = vmatprep.subr.mxu0 0.0
    %178 = vmatpush1.msra.mxu0 0.0
    %179 = vmatprep.subr.mxu0 0.0
    %180 = vmatpush1.msra.mxu0 0.0
    %181 = vmatprep.subr.mxu0 0.0
    %182 = vmatpush1.msra.mxu0 0.0
    %183 = vmatprep.subr.mxu0 0.0
    %184 = vmatpush1.msra.mxu0 0.0
    %185 = vmatprep.subr.mxu0 0.0
    %186 = vmatpush1.msra.mxu0 0.0
    %187 = vmatprep.subr.mxu0 0.0
    %188 = vmatpush1.msra.mxu0 0.0
    %189 = vmatprep.subr.mxu0 0.0
    %190 = vmatpush1.msra.mxu0 0.0
    %191 = vmatprep.subr.mxu0 0.0
    %192 = vmatpush1.msra.mxu0 0.0
    %193 = vmatprep.subr.mxu0 0.0
    %194 = vmatpush1.msra.mxu0 0.0
    %195 = vmatprep.subr.mxu0 0.0
    %196 = vmatpush1.msra.mxu0 0.0
    %197 = vmatprep.subr.mxu0 0.0
    %198 = vmatpush1.msra.mxu0 %v168
    %199 = vmatprep.subr.mxu0 0.0
    %200 = vmatpush1.msra.mxu0 %v167
    %201 = vmatprep.subr.mxu0 0.0
    %202 = vmatpush1.msra.mxu0 %v166
    %203 = vmatprep.subr.mxu0 0.0
    %204 = vmatpush1.msra.mxu0 %v165
    %205 = vmatprep.subr.mxu0 0.0
    %206 = vmatpush2.msra.mxu0 0.0
    %207 = vmatprep.subr.mxu0 0.0
    %208 = vmatpush2.msra.mxu0 0.0
    %209 = vmatprep.subr.mxu0 0.0
    %210 = vmatpush2.msra.mxu0 0.0
    %211 = vmatprep.subr.mxu0 0.0
    %212 = vmatpush2.msra.mxu0 0.0
    %213 = vmatprep.subr.mxu0 0.0
    %214 = vmatpush2.msra.mxu0 0.0
    %215 = vmatprep.subr.mxu0 0.0
    %216 = vmatpush2.msra.mxu0 0.0
    %217 = vmatprep.subr.mxu0 0.0
    %218 = vmatpush2.msra.mxu0 0.0
    %219 = vmatprep.subr.mxu0 0.0
    %220 = vmatpush2.msra.mxu0 0.0
    %221 = vmatprep.subr.mxu0 0.0
    %222 = vmatpush2.msra.mxu0 0.0
    %223 = vmatprep.subr.mxu0 0.0
    %224 = vmatpush2.msra.mxu0 0.0
    %225 = vmatprep.subr.mxu0 0.0
    %226 = vmatpush2.msra.mxu0 0.0
    %227 = vmatprep.subr.mxu0 0.0
    %228 = vmatpush2.msra.mxu0 0.0
    %229 = vmatprep.subr.mxu0 0.0
    %230 = vmatpush2.msra.mxu0 0.0
    %231 = vmatprep.subr.mxu0 0.0
    %232 = vmatpush2.msra.mxu0 0.0
    %233 = vmatprep.subr.mxu0 0.0
    %234 = vmatpush2.msra.mxu0 0.0
    %235 = vmatprep.subr.mxu0 0.0
    %236 = vmatpush2.msra.mxu0 0.0
    %237 = vmatprep.mubr.f32.mxu0 0.0
    %238 = vmatmul.mubr.f32.gmra.mxu0 %v171
    %v239 = vpop.f32.mrf.mxu0
    %v240 = vadd.f32 0.0, %v239
    %v241 = vpop.f32.mrf.mxu0
    %242 = vdwg.mxu0
    %v243 = vadd.f32 %v127, %v240
    %v244 = vxor.u32 %v243, 2147483648
    %v245 = vmul.f32 %v244, 1.442695
    %v246 = vpow.pop %v245
    %v247 = vadd.f32 %v246, 1.0
    %v248 = vrcp.pop %v247
    %v249 = vmul.f32 1.0, %v248
    %v250 = vtanh.pop %v243
    %v251 = vmul.f32 %v249, 0.0
    %253 = vrot.lane.b32.xlu0 %v250, 32
    %v254 = vpop.permute.xlu0 %253
    %v256 = vmul.f32 %v249, %v254
    %258 = vrot.lane.b32.xlu0 %v256, 32
    %v259 = vpop.permute.xlu0 %258
    %v261 = vadd.f32 %v251, %v259
    %v262 = vtanh.pop %v261
    %264 = vrot.lane.b32.xlu0 %v262, 32
    %v265 = vpop.permute.xlu0 %264
    %v267 = vmul.f32 %v249, %v265
    %269 = vrot.lane.b32.xlu0 %v267, 64
    %v270 = vpop.permute.xlu0 %269
    %v271 = vsel %vm169, %v270, 0
    %273 = vmatprep.subr.mxu0 0.0
    %274 = vmatpush1.msra.mxu0 0.0
    %275 = vmatprep.subr.mxu0 0.0
    %276 = vmatpush1.msra.mxu0 0.0
    %277 = vmatprep.subr.mxu0 0.0
    %278 = vmatpush1.msra.mxu0 0.0
    %279 = vmatprep.subr.mxu0 0.0
    %280 = vmatpush1.msra.mxu0 0.0
    %281 = vmatprep.subr.mxu0 0.0
    %282 = vmatpush1.msra.mxu0 0.0
    %283 = vmatprep.subr.mxu0 0.0
    %284 = vmatpush1.msra.mxu0 0.0
    %285 = vmatprep.subr.mxu0 0.0
    %286 = vmatpush1.msra.mxu0 0.0
    %287 = vmatprep.subr.mxu0 0.0
    %288 = vmatpush1.msra.mxu0 0.0
    %289 = vmatprep.subr.mxu0 0.0
    %290 = vmatpush1.msra.mxu0 0.0
    %291 = vmatprep.subr.mxu0 0.0
    %292 = vmatpush1.msra.mxu0 0.0
    %293 = vmatprep.subr.mxu0 0.0
    %294 = vmatpush1.msra.mxu0 0.0
    %295 = vmatprep.subr.mxu0 0.0
    %296 = vmatpush1.msra.mxu0 0.0
    %297 = vmatprep.subr.mxu0 0.0
    %298 = vmatpush1.msra.mxu0 %v168
    %299 = vmatprep.subr.mxu0 0.0
    %300 = vmatpush1.msra.mxu0 %v167
    %301 = vmatprep.subr.mxu0 0.0
    %302 = vmatpush1.msra.mxu0 %v166
    %303 = vmatprep.subr.mxu0 0.0
    %304 = vmatpush1.msra.mxu0 %v165
    %305 = vmatprep.subr.mxu0 0.0
    %306 = vmatpush2.msra.mxu0 0.0
    %307 = vmatprep.subr.mxu0 0.0
    %308 = vmatpush2.msra.mxu0 0.0
    %309 = vmatprep.subr.mxu0 0.0
    %310 = vmatpush2.msra.mxu0 0.0
    %311 = vmatprep.subr.mxu0 0.0
    %312 = vmatpush2.msra.mxu0 0.0
    %313 = vmatprep.subr.mxu0 0.0
    %314 = vmatpush2.msra.mxu0 0.0
    %315 = vmatprep.subr.mxu0 0.0
    %316 = vmatpush2.msra.mxu0 0.0
    %317 = vmatprep.subr.mxu0 0.0
    %318 = vmatpush2.msra.mxu0 0.0
    %319 = vmatprep.subr.mxu0 0.0
    %320 = vmatpush2.msra.mxu0 0.0
    %321 = vmatprep.subr.mxu0 0.0
    %322 = vmatpush2.msra.mxu0 0.0
    %323 = vmatprep.subr.mxu0 0.0
    %324 = vmatpush2.msra.mxu0 0.0
    %325 = vmatprep.subr.mxu0 0.0
    %326 = vmatpush2.msra.mxu0 0.0
    %327 = vmatprep.subr.mxu0 0.0
    %328 = vmatpush2.msra.mxu0 0.0
    %329 = vmatprep.subr.mxu0 0.0
    %330 = vmatpush2.msra.mxu0 0.0
    %331 = vmatprep.subr.mxu0 0.0
    %332 = vmatpush2.msra.mxu0 0.0
    %333 = vmatprep.subr.mxu0 0.0
    %334 = vmatpush2.msra.mxu0 0.0
    %335 = vmatprep.subr.mxu0 0.0
    %336 = vmatpush2.msra.mxu0 0.0
    %337 = vmatprep.mubr.f32.mxu0 0.0
    %338 = vmatmul.mubr.f32.gmra.mxu0 %v271
    %v339 = vpop.f32.mrf.mxu0
    %v340 = vadd.f32 0.0, %v339
    %v341 = vpop.f32.mrf.mxu0
    %342 = vdwg.mxu0
    %v343 = vadd.f32 %v132, %v340
    %v344 = vxor.u32 %v343, 2147483648
    %v345 = vmul.f32 %v344, 1.442695
    %v346 = vpow.pop %v345
    %v347 = vadd.f32 %v346, 1.0
    %v348 = vrcp.pop %v347
    %v349 = vmul.f32 1.0, %v348
    %v350 = vtanh.pop %v343
    %v351 = vmul.f32 %v349, %v261
    %353 = vrot.lane.b32.xlu0 %v350, 32
    %v354 = vpop.permute.xlu0 %353
    %v356 = vmul.f32 %v349, %v354
    %358 = vrot.lane.b32.xlu0 %v356, 32
    %v359 = vpop.permute.xlu0 %358
    %v361 = vadd.f32 %v351, %v359
    %v362 = vtanh.pop %v361
    %364 = vrot.lane.b32.xlu0 %v362, 32
    %v365 = vpop.permute.xlu0 %364
    %v367 = vmul.f32 %v349, %v365
    %369 = vrot.lane.b32.xlu0 %v367, 64
    %v370 = vpop.permute.xlu0 %369
    %v371 = vsel %vm169, %v370, 0
    %373 = vmatprep.subr.mxu0 0.0
    %374 = vmatpush1.msra.mxu0 0.0
    %375 = vmatprep.subr.mxu0 0.0
    %376 = vmatpush1.msra.mxu0 0.0
    %377 = vmatprep.subr.mxu0 0.0
    %378 = vmatpush1.msra.mxu0 0.0
    %379 = vmatprep.subr.mxu0 0.0
    %380 = vmatpush1.msra.mxu0 0.0
    %381 = vmatprep.subr.mxu0 0.0
    %382 = vmatpush1.msra.mxu0 0.0
    %383 = vmatprep.subr.mxu0 0.0
    %384 = vmatpush1.msra.mxu0 0.0
    %385 = vmatprep.subr.mxu0 0.0
    %386 = vmatpush1.msra.mxu0 0.0
    %387 = vmatprep.subr.mxu0 0.0
    %388 = vmatpush1.msra.mxu0 0.0
    %389 = vmatprep.subr.mxu0 0.0
    %390 = vmatpush1.msra.mxu0 0.0
    %391 = vmatprep.subr.mxu0 0.0
    %392 = vmatpush1.msra.mxu0 0.0
    %393 = vmatprep.subr.mxu0 0.0
    %394 = vmatpush1.msra.mxu0 0.0
    %395 = vmatprep.subr.mxu0 0.0
    %396 = vmatpush1.msra.mxu0 0.0
    %397 = vmatprep.subr.mxu0 0.0
    %398 = vmatpush1.msra.mxu0 %v168
    %399 = vmatprep.subr.mxu0 0.0
    %400 = vmatpush1.msra.mxu0 %v167
    %401 = vmatprep.subr.mxu0 0.0
    %402 = vmatpush1.msra.mxu0 %v166
    %403 = vmatprep.subr.mxu0 0.0
    %404 = vmatpush1.msra.mxu0 %v165
    %405 = vmatprep.subr.mxu0 0.0
    %406 = vmatpush2.msra.mxu0 0.0
    %407 = vmatprep.subr.mxu0 0.0
    %408 = vmatpush2.msra.mxu0 0.0
    %409 = vmatprep.subr.mxu0 0.0
    %410 = vmatpush2.msra.mxu0 0.0
    %411 = vmatprep.subr.mxu0 0.0
    %412 = vmatpush2.msra.mxu0 0.0
    %413 = vmatprep.subr.mxu0 0.0
    %414 = vmatpush2.msra.mxu0 0.0
    %415 = vmatprep.subr.mxu0 0.0
    %416 = vmatpush2.msra.mxu0 0.0
    %417 = vmatprep.subr.mxu0 0.0
    %418 = vmatpush2.msra.mxu0 0.0
    %419 = vmatprep.subr.mxu0 0.0
    %420 = vmatpush2.msra.mxu0 0.0
    %421 = vmatprep.subr.mxu0 0.0
    %422 = vmatpush2.msra.mxu0 0.0
    %423 = vmatprep.subr.mxu0 0.0
    %424 = vmatpush2.msra.mxu0 0.0
    %425 = vmatprep.subr.mxu0 0.0
    %426 = vmatpush2.msra.mxu0 0.0
    %427 = vmatprep.subr.mxu0 0.0
    %428 = vmatpush2.msra.mxu0 0.0
    %429 = vmatprep.subr.mxu0 0.0
    %430 = vmatpush2.msra.mxu0 0.0
    %431 = vmatprep.subr.mxu0 0.0
    %432 = vmatpush2.msra.mxu0 0.0
    %433 = vmatprep.subr.mxu0 0.0
    %434 = vmatpush2.msra.mxu0 0.0
    %435 = vmatprep.subr.mxu0 0.0
    %436 = vmatpush2.msra.mxu0 0.0
    %437 = vmatprep.mubr.f32.mxu0 0.0
    %438 = vmatmul.mubr.f32.gmra.mxu0 %v371
    %v439 = vpop.f32.mrf.mxu0
    %v440 = vadd.f32 0.0, %v439
    %v441 = vpop.f32.mrf.mxu0
    %442 = vdwg.mxu0
    %v443 = vadd.f32 %v137, %v440
    %v444 = vxor.u32 %v443, 2147483648
    %v445 = vmul.f32 %v444, 1.442695
    %v446 = vpow.pop %v445
    %v447 = vadd.f32 %v446, 1.0
    %v448 = vrcp.pop %v447
    %v449 = vmul.f32 1.0, %v448
    %v450 = vtanh.pop %v443
    %v451 = vmul.f32 %v449, %v361
    %453 = vrot.lane.b32.xlu0 %v450, 32
    %v454 = vpop.permute.xlu0 %453
    %v456 = vmul.f32 %v449, %v454
    %458 = vrot.lane.b32.xlu0 %v456, 32
    %v459 = vpop.permute.xlu0 %458
    %v461 = vadd.f32 %v451, %v459
    %v462 = vtanh.pop %v461
    %464 = vrot.lane.b32.xlu0 %v462, 32
    %v465 = vpop.permute.xlu0 %464
    %v467 = vmul.f32 %v449, %v465
    %469 = vrot.lane.b32.xlu0 %v467, 64
    %v470 = vpop.permute.xlu0 %469
    %v471 = vsel %vm169, %v470, 0
    %473 = vmatprep.subr.mxu0 0.0
    %474 = vmatpush1.msra.mxu0 0.0
    %475 = vmatprep.subr.mxu0 0.0
    %476 = vmatpush1.msra.mxu0 0.0
    %477 = vmatprep.subr.mxu0 0.0
    %478 = vmatpush1.msra.mxu0 0.0
    %479 = vmatprep.subr.mxu0 0.0
    %480 = vmatpush1.msra.mxu0 0.0
    %481 = vmatprep.subr.mxu0 0.0
    %482 = vmatpush1.msra.mxu0 0.0
    %483 = vmatprep.subr.mxu0 0.0
    %484 = vmatpush1.msra.mxu0 0.0
    %485 = vmatprep.subr.mxu0 0.0
    %486 = vmatpush1.msra.mxu0 0.0
    %487 = vmatprep.subr.mxu0 0.0
    %488 = vmatpush1.msra.mxu0 0.0
    %489 = vmatprep.subr.mxu0 0.0
    %490 = vmatpush1.msra.mxu0 0.0
    %491 = vmatprep.subr.mxu0 0.0
    %492 = vmatpush1.msra.mxu0 0.0
    %493 = vmatprep.subr.mxu0 0.0
    %494 = vmatpush1.msra.mxu0 0.0
    %495 = vmatprep.subr.mxu0 0.0
    %496 = vmatpush1.msra.mxu0 0.0
    %497 = vmatprep.subr.mxu0 0.0
    %498 = vmatpush1.msra.mxu0 %v168
    %499 = vmatprep.subr.mxu0 0.0
    %500 = vmatpush1.msra.mxu0 %v167
    %501 = vmatprep.subr.mxu0 0.0
    %502 = vmatpush1.msra.mxu0 %v166
    %503 = vmatprep.subr.mxu0 0.0
    %504 = vmatpush1.msra.mxu0 %v165
    %505 = vmatprep.subr.mxu0 0.0
    %506 = vmatpush2.msra.mxu0 0.0
    %507 = vmatprep.subr.mxu0 0.0
    %508 = vmatpush2.msra.mxu0 0.0
    %509 = vmatprep.subr.mxu0 0.0
    %510 = vmatpush2.msra.mxu0 0.0
    %511 = vmatprep.subr.mxu0 0.0
    %512 = vmatpush2.msra.mxu0 0.0
    %513 = vmatprep.subr.mxu0 0.0
    %514 = vmatpush2.msra.mxu0 0.0
    %515 = vmatprep.subr.mxu0 0.0
    %516 = vmatpush2.msra.mxu0 0.0
    %517 = vmatprep.subr.mxu0 0.0
    %518 = vmatpush2.msra.mxu0 0.0
    %519 = vmatprep.subr.mxu0 0.0
    %520 = vmatpush2.msra.mxu0 0.0
    %521 = vmatprep.subr.mxu0 0.0
    %522 = vmatpush2.msra.mxu0 0.0
    %523 = vmatprep.subr.mxu0 0.0
    %524 = vmatpush2.msra.mxu0 0.0
    %525 = vmatprep.subr.mxu0 0.0
    %526 = vmatpush2.msra.mxu0 0.0
    %527 = vmatprep.subr.mxu0 0.0
    %528 = vmatpush2.msra.mxu0 0.0
    %529 = vmatprep.subr.mxu0 0.0
    %530 = vmatpush2.msra.mxu0 0.0
    %531 = vmatprep.subr.mxu0 0.0
    %532 = vmatpush2.msra.mxu0 0.0
    %533 = vmatprep.subr.mxu0 0.0
    %534 = vmatpush2.msra.mxu0 0.0
    %535 = vmatprep.subr.mxu0 0.0
    %536 = vmatpush2.msra.mxu0 0.0
    %537 = vmatprep.mubr.f32.mxu0 0.0
    %538 = vmatmul.mubr.f32.gmra.mxu0 %v471
    %v539 = vpop.f32.mrf.mxu0
    %v540 = vadd.f32 0.0, %v539
    %v541 = vpop.f32.mrf.mxu0
    %542 = vdwg.mxu0
    %v543 = vadd.f32 %v142, %v540
    %v544 = vxor.u32 %v543, 2147483648
    %v545 = vmul.f32 %v544, 1.442695
    %v546 = vpow.pop %v545
    %v547 = vadd.f32 %v546, 1.0
    %v548 = vrcp.pop %v547
    %v549 = vmul.f32 1.0, %v548
    %v550 = vtanh.pop %v543
    %v551 = vmul.f32 %v549, %v461
    %553 = vrot.lane.b32.xlu0 %v550, 32
    %v554 = vpop.permute.xlu0 %553
    %v556 = vmul.f32 %v549, %v554
    %558 = vrot.lane.b32.xlu0 %v556, 32
    %v559 = vpop.permute.xlu0 %558
    %v561 = vadd.f32 %v551, %v559
    %v562 = vtanh.pop %v561
    %564 = vrot.lane.b32.xlu0 %v562, 32
    %v565 = vpop.permute.xlu0 %564
    %v567 = vmul.f32 %v549, %v565
    %569 = vrot.lane.b32.xlu0 %v567, 64
    %v570 = vpop.permute.xlu0 %569
    %v571 = vsel %vm169, %v570, 0
    %573 = vmatprep.subr.mxu0 0.0
    %574 = vmatpush1.msra.mxu0 0.0
    %575 = vmatprep.subr.mxu0 0.0
    %576 = vmatpush1.msra.mxu0 0.0
    %577 = vmatprep.subr.mxu0 0.0
    %578 = vmatpush1.msra.mxu0 0.0
    %579 = vmatprep.subr.mxu0 0.0
    %580 = vmatpush1.msra.mxu0 0.0
    %581 = vmatprep.subr.mxu0 0.0
    %582 = vmatpush1.msra.mxu0 0.0
    %583 = vmatprep.subr.mxu0 0.0
    %584 = vmatpush1.msra.mxu0 0.0
    %585 = vmatprep.subr.mxu0 0.0
    %586 = vmatpush1.msra.mxu0 0.0
    %587 = vmatprep.subr.mxu0 0.0
    %588 = vmatpush1.msra.mxu0 0.0
    %589 = vmatprep.subr.mxu0 0.0
    %590 = vmatpush1.msra.mxu0 0.0
    %591 = vmatprep.subr.mxu0 0.0
    %592 = vmatpush1.msra.mxu0 0.0
    %593 = vmatprep.subr.mxu0 0.0
    %594 = vmatpush1.msra.mxu0 0.0
    %595 = vmatprep.subr.mxu0 0.0
    %596 = vmatpush1.msra.mxu0 0.0
    %597 = vmatprep.subr.mxu0 0.0
    %598 = vmatpush1.msra.mxu0 %v168
    %599 = vmatprep.subr.mxu0 0.0
    %600 = vmatpush1.msra.mxu0 %v167
    %601 = vmatprep.subr.mxu0 0.0
    %602 = vmatpush1.msra.mxu0 %v166
    %603 = vmatprep.subr.mxu0 0.0
    %604 = vmatpush1.msra.mxu0 %v165
    %605 = vmatprep.subr.mxu0 0.0
    %606 = vmatpush2.msra.mxu0 0.0
    %607 = vmatprep.subr.mxu0 0.0
    %608 = vmatpush2.msra.mxu0 0.0
    %609 = vmatprep.subr.mxu0 0.0
    %610 = vmatpush2.msra.mxu0 0.0
    %611 = vmatprep.subr.mxu0 0.0
    %612 = vmatpush2.msra.mxu0 0.0
    %613 = vmatprep.subr.mxu0 0.0
    %614 = vmatpush2.msra.mxu0 0.0
    %615 = vmatprep.subr.mxu0 0.0
    %616 = vmatpush2.msra.mxu0 0.0
    %617 = vmatprep.subr.mxu0 0.0
    %618 = vmatpush2.msra.mxu0 0.0
    %619 = vmatprep.subr.mxu0 0.0
    %620 = vmatpush2.msra.mxu0 0.0
    %621 = vmatprep.subr.mxu0 0.0
    %622 = vmatpush2.msra.mxu0 0.0
    %623 = vmatprep.subr.mxu0 0.0
    %624 = vmatpush2.msra.mxu0 0.0
    %625 = vmatprep.subr.mxu0 0.0
    %626 = vmatpush2.msra.mxu0 0.0
    %627 = vmatprep.subr.mxu0 0.0
    %628 = vmatpush2.msra.mxu0 0.0
    %629 = vmatprep.subr.mxu0 0.0
    %630 = vmatpush2.msra.mxu0 0.0
    %631 = vmatprep.subr.mxu0 0.0
    %632 = vmatpush2.msra.mxu0 0.0
    %633 = vmatprep.subr.mxu0 0.0
    %634 = vmatpush2.msra.mxu0 0.0
    %635 = vmatprep.subr.mxu0 0.0
    %636 = vmatpush2.msra.mxu0 0.0
    %637 = vmatprep.mubr.f32.mxu0 0.0
    %638 = vmatmul.mubr.f32.gmra.mxu0 %v571
    %v639 = vpop.f32.mrf.mxu0
    %v640 = vadd.f32 0.0, %v639
    %v641 = vpop.f32.mrf.mxu0
    %642 = vdwg.mxu0
    %v643 = vadd.f32 %v147, %v640
    %v644 = vxor.u32 %v643, 2147483648
    %v645 = vmul.f32 %v644, 1.442695
    %v646 = vpow.pop %v645
    %v647 = vadd.f32 %v646, 1.0
    %v648 = vrcp.pop %v647
    %v649 = vmul.f32 1.0, %v648
    %v650 = vtanh.pop %v643
    %v651 = vmul.f32 %v649, %v561
    %653 = vrot.lane.b32.xlu0 %v650, 32
    %v654 = vpop.permute.xlu0 %653
    %v656 = vmul.f32 %v649, %v654
    %658 = vrot.lane.b32.xlu0 %v656, 32
    %v659 = vpop.permute.xlu0 %658
    %v661 = vadd.f32 %v651, %v659
    %v662 = vtanh.pop %v661
    %664 = vrot.lane.b32.xlu0 %v662, 32
    %v665 = vpop.permute.xlu0 %664
    %v667 = vmul.f32 %v649, %v665
    %669 = vrot.lane.b32.xlu0 %v667, 64
    %v670 = vpop.permute.xlu0 %669
    %v671 = vsel %vm169, %v670, 0
    %673 = vmatprep.subr.mxu0 0.0
    %674 = vmatpush1.msra.mxu0 0.0
    %675 = vmatprep.subr.mxu0 0.0
    %676 = vmatpush1.msra.mxu0 0.0
    %677 = vmatprep.subr.mxu0 0.0
    %678 = vmatpush1.msra.mxu0 0.0
    %679 = vmatprep.subr.mxu0 0.0
    %680 = vmatpush1.msra.mxu0 0.0
    %681 = vmatprep.subr.mxu0 0.0
    %682 = vmatpush1.msra.mxu0 0.0
    %683 = vmatprep.subr.mxu0 0.0
    %684 = vmatpush1.msra.mxu0 0.0
    %685 = vmatprep.subr.mxu0 0.0
    %686 = vmatpush1.msra.mxu0 0.0
    %687 = vmatprep.subr.mxu0 0.0
    %688 = vmatpush1.msra.mxu0 0.0
    %689 = vmatprep.subr.mxu0 0.0
    %690 = vmatpush1.msra.mxu0 0.0
    %691 = vmatprep.subr.mxu0 0.0
    %692 = vmatpush1.msra.mxu0 0.0
    %693 = vmatprep.subr.mxu0 0.0
    %694 = vmatpush1.msra.mxu0 0.0
    %695 = vmatprep.subr.mxu0 0.0
    %696 = vmatpush1.msra.mxu0 0.0
    %697 = vmatprep.subr.mxu0 0.0
    %698 = vmatpush1.msra.mxu0 %v168
    %699 = vmatprep.subr.mxu0 0.0
    %700 = vmatpush1.msra.mxu0 %v167
    %701 = vmatprep.subr.mxu0 0.0
    %702 = vmatpush1.msra.mxu0 %v166
    %703 = vmatprep.subr.mxu0 0.0
    %704 = vmatpush1.msra.mxu0 %v165
    %705 = vmatprep.subr.mxu0 0.0
    %706 = vmatpush2.msra.mxu0 0.0
    %707 = vmatprep.subr.mxu0 0.0
    %708 = vmatpush2.msra.mxu0 0.0
    %709 = vmatprep.subr.mxu0 0.0
    %710 = vmatpush2.msra.mxu0 0.0
    %711 = vmatprep.subr.mxu0 0.0
    %712 = vmatpush2.msra.mxu0 0.0
    %713 = vmatprep.subr.mxu0 0.0
    %714 = vmatpush2.msra.mxu0 0.0
    %715 = vmatprep.subr.mxu0 0.0
    %716 = vmatpush2.msra.mxu0 0.0
    %717 = vmatprep.subr.mxu0 0.0
    %718 = vmatpush2.msra.mxu0 0.0
    %719 = vmatprep.subr.mxu0 0.0
    %720 = vmatpush2.msra.mxu0 0.0
    %721 = vmatprep.subr.mxu0 0.0
    %722 = vmatpush2.msra.mxu0 0.0
    %723 = vmatprep.subr.mxu0 0.0
    %724 = vmatpush2.msra.mxu0 0.0
    %725 = vmatprep.subr.mxu0 0.0
    %726 = vmatpush2.msra.mxu0 0.0
    %727 = vmatprep.subr.mxu0 0.0
    %728 = vmatpush2.msra.mxu0 0.0
    %729 = vmatprep.subr.mxu0 0.0
    %730 = vmatpush2.msra.mxu0 0.0
    %731 = vmatprep.subr.mxu0 0.0
    %732 = vmatpush2.msra.mxu0 0.0
    %733 = vmatprep.subr.mxu0 0.0
    %734 = vmatpush2.msra.mxu0 0.0
    %735 = vmatprep.subr.mxu0 0.0
    %736 = vmatpush2.msra.mxu0 0.0
    %737 = vmatprep.mubr.f32.mxu0 0.0
    %738 = vmatmul.mubr.f32.gmra.mxu0 %v671
    %v739 = vpop.f32.mrf.mxu0
    %v740 = vadd.f32 0.0, %v739
    %v741 = vpop.f32.mrf.mxu0
    %742 = vdwg.mxu0
    %v743 = vadd.f32 %v152, %v740
    %v744 = vxor.u32 %v743, 2147483648
    %v745 = vmul.f32 %v744, 1.442695
    %v746 = vpow.pop %v745
    %v747 = vadd.f32 %v746, 1.0
    %v748 = vrcp.pop %v747
    %v749 = vmul.f32 1.0, %v748
    %v750 = vtanh.pop %v743
    %v751 = vmul.f32 %v749, %v661
    %753 = vrot.lane.b32.xlu0 %v750, 32
    %v754 = vpop.permute.xlu0 %753
    %v756 = vmul.f32 %v749, %v754
    %758 = vrot.lane.b32.xlu0 %v756, 32
    %v759 = vpop.permute.xlu0 %758
    %v761 = vadd.f32 %v751, %v759
    %v762 = vtanh.pop %v761
    %764 = vrot.lane.b32.xlu0 %v762, 32
    %v765 = vpop.permute.xlu0 %764
    %v767 = vmul.f32 %v749, %v765
    %769 = vrot.lane.b32.xlu0 %v767, 64
    %v770 = vpop.permute.xlu0 %769
    %v771 = vsel %vm169, %v770, 0
    %773 = vmatprep.subr.mxu0 0.0
    %774 = vmatpush1.msra.mxu0 0.0
    %775 = vmatprep.subr.mxu0 0.0
    %776 = vmatpush1.msra.mxu0 0.0
    %777 = vmatprep.subr.mxu0 0.0
    %778 = vmatpush1.msra.mxu0 0.0
    %779 = vmatprep.subr.mxu0 0.0
    %780 = vmatpush1.msra.mxu0 0.0
    %781 = vmatprep.subr.mxu0 0.0
    %782 = vmatpush1.msra.mxu0 0.0
    %783 = vmatprep.subr.mxu0 0.0
    %784 = vmatpush1.msra.mxu0 0.0
    %785 = vmatprep.subr.mxu0 0.0
    %786 = vmatpush1.msra.mxu0 0.0
    %787 = vmatprep.subr.mxu0 0.0
    %788 = vmatpush1.msra.mxu0 0.0
    %789 = vmatprep.subr.mxu0 0.0
    %790 = vmatpush1.msra.mxu0 0.0
    %791 = vmatprep.subr.mxu0 0.0
    %792 = vmatpush1.msra.mxu0 0.0
    %793 = vmatprep.subr.mxu0 0.0
    %794 = vmatpush1.msra.mxu0 0.0
    %795 = vmatprep.subr.mxu0 0.0
    %796 = vmatpush1.msra.mxu0 0.0
    %797 = vmatprep.subr.mxu0 0.0
    %798 = vmatpush1.msra.mxu0 %v168
    %799 = vmatprep.subr.mxu0 0.0
    %800 = vmatpush1.msra.mxu0 %v167
    %801 = vmatprep.subr.mxu0 0.0
    %802 = vmatpush1.msra.mxu0 %v166
    %803 = vmatprep.subr.mxu0 0.0
    %804 = vmatpush1.msra.mxu0 %v165
    %805 = vmatprep.subr.mxu0 0.0
    %806 = vmatpush2.msra.mxu0 0.0
    %807 = vmatprep.subr.mxu0 0.0
    %808 = vmatpush2.msra.mxu0 0.0
    %809 = vmatprep.subr.mxu0 0.0
    %810 = vmatpush2.msra.mxu0 0.0
    %811 = vmatprep.subr.mxu0 0.0
    %812 = vmatpush2.msra.mxu0 0.0
    %813 = vmatprep.subr.mxu0 0.0
    %814 = vmatpush2.msra.mxu0 0.0
    %815 = vmatprep.subr.mxu0 0.0
    %816 = vmatpush2.msra.mxu0 0.0
    %817 = vmatprep.subr.mxu0 0.0
    %818 = vmatpush2.msra.mxu0 0.0
    %819 = vmatprep.subr.mxu0 0.0
    %820 = vmatpush2.msra.mxu0 0.0
    %821 = vmatprep.subr.mxu0 0.0
    %822 = vmatpush2.msra.mxu0 0.0
    %823 = vmatprep.subr.mxu0 0.0
    %824 = vmatpush2.msra.mxu0 0.0
    %825 = vmatprep.subr.mxu0 0.0
    %826 = vmatpush2.msra.mxu0 0.0
    %827 = vmatprep.subr.mxu0 0.0
    %828 = vmatpush2.msra.mxu0 0.0
    %829 = vmatprep.subr.mxu0 0.0
    %830 = vmatpush2.msra.mxu0 0.0
    %831 = vmatprep.subr.mxu0 0.0
    %832 = vmatpush2.msra.mxu0 0.0
    %833 = vmatprep.subr.mxu0 0.0
    %834 = vmatpush2.msra.mxu0 0.0
    %835 = vmatprep.subr.mxu0 0.0
    %836 = vmatpush2.msra.mxu0 0.0
    %837 = vmatprep.mubr.f32.mxu0 0.0
    %838 = vmatmul.mubr.f32.gmra.mxu0 %v771
    %v839 = vpop.f32.mrf.mxu0
    %v840 = vadd.f32 0.0, %v839
    %v841 = vpop.f32.mrf.mxu0
    %842 = vdwg.mxu0
    %v843 = vadd.f32 %v157, %v840
    %v844 = vxor.u32 %v843, 2147483648
    %v845 = vmul.f32 %v844, 1.442695
    %v846 = vpow.pop %v845
    %v847 = vadd.f32 %v846, 1.0
    %v848 = vrcp.pop %v847
    %v849 = vmul.f32 1.0, %v848
    %v850 = vtanh.pop %v843
    %v851 = vmul.f32 %v849, %v761
    %853 = vrot.lane.b32.xlu0 %v850, 32
    %v854 = vpop.permute.xlu0 %853
    %v856 = vmul.f32 %v849, %v854
    %858 = vrot.lane.b32.xlu0 %v856, 32
    %v859 = vpop.permute.xlu0 %858
    %v861 = vadd.f32 %v851, %v859
    %v862 = vtanh.pop %v861
    %864 = vrot.lane.b32.xlu0 %v862, 32
    %v865 = vpop.permute.xlu0 %864
    %v867 = vmul.f32 %v849, %v865
    %869 = vrot.lane.b32.xlu0 %v867, 64
    %v870 = vpop.permute.xlu0 %869
    %v871 = vsel %vm169, %v870, 0
    %873 = vmatprep.subr.mxu0 0.0
    %874 = vmatpush1.msra.mxu0 0.0
    %875 = vmatprep.subr.mxu0 0.0
    %876 = vmatpush1.msra.mxu0 0.0
    %877 = vmatprep.subr.mxu0 0.0
    %878 = vmatpush1.msra.mxu0 0.0
    %879 = vmatprep.subr.mxu0 0.0
    %880 = vmatpush1.msra.mxu0 0.0
    %881 = vmatprep.subr.mxu0 0.0
    %882 = vmatpush1.msra.mxu0 0.0
    %883 = vmatprep.subr.mxu0 0.0
    %884 = vmatpush1.msra.mxu0 0.0
    %885 = vmatprep.subr.mxu0 0.0
    %886 = vmatpush1.msra.mxu0 0.0
    %887 = vmatprep.subr.mxu0 0.0
    %888 = vmatpush1.msra.mxu0 0.0
    %889 = vmatprep.subr.mxu0 0.0
    %890 = vmatpush1.msra.mxu0 0.0
    %891 = vmatprep.subr.mxu0 0.0
    %892 = vmatpush1.msra.mxu0 0.0
    %893 = vmatprep.subr.mxu0 0.0
    %894 = vmatpush1.msra.mxu0 0.0
    %895 = vmatprep.subr.mxu0 0.0
    %896 = vmatpush1.msra.mxu0 0.0
    %897 = vmatprep.subr.mxu0 0.0
    %898 = vmatpush1.msra.mxu0 %v168
    %899 = vmatprep.subr.mxu0 0.0
    %900 = vmatpush1.msra.mxu0 %v167
    %901 = vmatprep.subr.mxu0 0.0
    %902 = vmatpush1.msra.mxu0 %v166
    %903 = vmatprep.subr.mxu0 0.0
    %904 = vmatpush1.msra.mxu0 %v165
    %905 = vmatprep.subr.mxu0 0.0
    %906 = vmatpush2.msra.mxu0 0.0
    %907 = vmatprep.subr.mxu0 0.0
    %908 = vmatpush2.msra.mxu0 0.0
    %909 = vmatprep.subr.mxu0 0.0
    %910 = vmatpush2.msra.mxu0 0.0
    %911 = vmatprep.subr.mxu0 0.0
    %912 = vmatpush2.msra.mxu0 0.0
    %913 = vmatprep.subr.mxu0 0.0
    %914 = vmatpush2.msra.mxu0 0.0
    %915 = vmatprep.subr.mxu0 0.0
    %916 = vmatpush2.msra.mxu0 0.0
    %917 = vmatprep.subr.mxu0 0.0
    %918 = vmatpush2.msra.mxu0 0.0
    %919 = vmatprep.subr.mxu0 0.0
    %920 = vmatpush2.msra.mxu0 0.0
    %921 = vmatprep.subr.mxu0 0.0
    %922 = vmatpush2.msra.mxu0 0.0
    %923 = vmatprep.subr.mxu0 0.0
    %924 = vmatpush2.msra.mxu0 0.0
    %925 = vmatprep.subr.mxu0 0.0
    %926 = vmatpush2.msra.mxu0 0.0
    %927 = vmatprep.subr.mxu0 0.0
    %928 = vmatpush2.msra.mxu0 0.0
    %929 = vmatprep.subr.mxu0 0.0
    %930 = vmatpush2.msra.mxu0 0.0
    %931 = vmatprep.subr.mxu0 0.0
    %932 = vmatpush2.msra.mxu0 0.0
    %933 = vmatprep.subr.mxu0 0.0
    %934 = vmatpush2.msra.mxu0 0.0
    %935 = vmatprep.subr.mxu0 0.0
    %936 = vmatpush2.msra.mxu0 0.0
    %937 = vmatprep.mubr.f32.mxu0 0.0
    %938 = vmatmul.mubr.f32.gmra.mxu0 %v871
    %v939 = vpop.f32.mrf.mxu0
    %v940 = vadd.f32 0.0, %v939
    %v941 = vpop.f32.mrf.mxu0
    %942 = vdwg.mxu0
    %v943 = vadd.f32 %v162, %v940
    %v944 = vxor.u32 %v943, 2147483648
    %v945 = vmul.f32 %v944, 1.442695
    %v946 = vpow.pop %v945
    %v947 = vadd.f32 %v946, 1.0
    %v948 = vrcp.pop %v947
    %v949 = vmul.f32 1.0, %v948
    %v950 = vtanh.pop %v943
    %v951 = vmul.f32 %v949, %v861
    %953 = vrot.lane.b32.xlu0 %v950, 32
    %v954 = vpop.permute.xlu0 %953
    %v956 = vmul.f32 %v949, %v954
    %958 = vrot.lane.b32.xlu0 %v956, 32
    %v959 = vpop.permute.xlu0 %958
    %v961 = vadd.f32 %v951, %v959
    %v962 = vtanh.pop %v961
    %964 = vrot.lane.b32.xlu0 %v962, 32
    %v965 = vpop.permute.xlu0 %964
    %v967 = vmul.f32 %v949, %v965
    %v968 = vlaneseq
    %v969 = vshrl.u32 %v968, 7
    %vm970 = vcmp.lt.s32.totalorder %v969, 4
    %v971 = vsel %vm970, %v267, -inf
    %v972 = vsel %vm970, %v367, -inf
    %v973 = vsel %vm970, %v467, -inf
    %v974 = vsel %vm970, %v567, -inf
    %v975 = vsel %vm970, %v667, -inf
    %v976 = vsel %vm970, %v767, -inf
    %v977 = vsel %vm970, %v867, -inf
    %v978 = vsel %vm970, %v967, -inf
    %vm979 = vcmask 785920
    %v980 = vsel %vm979, %v971, -inf
    %v981 = vrot.slane %v980, 4
    %v982 = vmax.f32 %v980, %v981
    %v983 = vrot.slane %v982, 2
    %v984 = vmax.f32 %v982, %v983
    %v985 = vrot.slane %v984, 1
    %v986 = vmax.f32 %v984, %v985
    %v987 = vsel %vm979, %v972, -inf
    %v988 = vrot.slane %v987, 4
    %v989 = vmax.f32 %v987, %v988
    %v990 = vrot.slane %v989, 2
    %v991 = vmax.f32 %v989, %v990
    %v992 = vrot.slane %v991, 1
    %v993 = vmax.f32 %v991, %v992
    %v994 = vsel %vm979, %v973, -inf
    %v995 = vrot.slane %v994, 4
    %v996 = vmax.f32 %v994, %v995
    %v997 = vrot.slane %v996, 2
    %v998 = vmax.f32 %v996, %v997
    %v999 = vrot.slane %v998, 1
    %v1000 = vmax.f32 %v998, %v999
    %v1001 = vsel %vm979, %v974, -inf
    %v1002 = vrot.slane %v1001, 4
    %v1003 = vmax.f32 %v1001, %v1002
    %v1004 = vrot.slane %v1003, 2
    %v1005 = vmax.f32 %v1003, %v1004
    %v1006 = vrot.slane %v1005, 1
    %v1007 = vmax.f32 %v1005, %v1006
    %v1008 = vsel %vm979, %v975, -inf
    %v1009 = vrot.slane %v1008, 4
    %v1010 = vmax.f32 %v1008, %v1009
    %v1011 = vrot.slane %v1010, 2
    %v1012 = vmax.f32 %v1010, %v1011
    %v1013 = vrot.slane %v1012, 1
    %v1014 = vmax.f32 %v1012, %v1013
    %v1015 = vsel %vm979, %v976, -inf
    %v1016 = vrot.slane %v1015, 4
    %v1017 = vmax.f32 %v1015, %v1016
    %v1018 = vrot.slane %v1017, 2
    %v1019 = vmax.f32 %v1017, %v1018
    %v1020 = vrot.slane %v1019, 1
    %v1021 = vmax.f32 %v1019, %v1020
    %v1022 = vsel %vm979, %v977, -inf
    %v1023 = vrot.slane %v1022, 4
    %v1024 = vmax.f32 %v1022, %v1023
    %v1025 = vrot.slane %v1024, 2
    %v1026 = vmax.f32 %v1024, %v1025
    %v1027 = vrot.slane %v1026, 1
    %v1028 = vmax.f32 %v1026, %v1027
    %v1029 = vsel %vm979, %v978, -inf
    %v1030 = vrot.slane %v1029, 4
    %v1031 = vmax.f32 %v1029, %v1030
    %v1032 = vrot.slane %v1031, 2
    %v1033 = vmax.f32 %v1031, %v1032
    %v1034 = vrot.slane %v1033, 1
    %v1035 = vmax.f32 %v1033, %v1034
    %v1036 = vsub.f32 %v267, %v986
    %v1037 = vsub.f32 %v367, %v993
    %v1038 = vsub.f32 %v467, %v1000
    %v1039 = vsub.f32 %v567, %v1007
    %v1040 = vsub.f32 %v667, %v1014
    %v1041 = vsub.f32 %v767, %v1021
    %v1042 = vsub.f32 %v867, %v1028
    %v1043 = vsub.f32 %v967, %v1035
    %v1044 = vmul.f32 %v1036, 1.442695
    %v1045 = vpow.pop %v1044
    %v1046 = vmul.f32 %v1037, 1.442695
    %v1047 = vpow.pop %v1046
    %v1048 = vmul.f32 %v1038, 1.442695
    %v1049 = vpow.pop %v1048
    %v1050 = vmul.f32 %v1039, 1.442695
    %v1051 = vpow.pop %v1050
    %v1052 = vmul.f32 %v1040, 1.442695
    %v1053 = vpow.pop %v1052
    %v1054 = vmul.f32 %v1041, 1.442695
    %v1055 = vpow.pop %v1054
    %v1056 = vmul.f32 %v1042, 1.442695
    %v1057 = vpow.pop %v1056
    %v1058 = vmul.f32 %v1043, 1.442695
    %v1059 = vpow.pop %v1058
    %v1060 = vsel %vm970, %v1045, 0.0
    %v1061 = vsel %vm970, %v1047, 0.0
    %v1062 = vsel %vm970, %v1049, 0.0
    %v1063 = vsel %vm970, %v1051, 0.0
    %v1064 = vsel %vm970, %v1053, 0.0
    %v1065 = vsel %vm970, %v1055, 0.0
    %v1066 = vsel %vm970, %v1057, 0.0
    %v1067 = vsel %vm970, %v1059, 0.0
    %v1068 = vsel %vm979, %v1060, 0.0
    %v1069 = vrot.slane %v1068, 4
    %v1070 = vadd.f32 %v1068, %v1069
    %v1071 = vrot.slane %v1070, 2
    %v1072 = vadd.f32 %v1070, %v1071
    %v1073 = vrot.slane %v1072, 1
    %v1074 = vadd.f32 %v1072, %v1073
    %v1075 = vsel %vm979, %v1061, 0.0
    %v1076 = vrot.slane %v1075, 4
    %v1077 = vadd.f32 %v1075, %v1076
    %v1078 = vrot.slane %v1077, 2
    %v1079 = vadd.f32 %v1077, %v1078
    %v1080 = vrot.slane %v1079, 1
    %v1081 = vadd.f32 %v1079, %v1080
    %v1082 = vsel %vm979, %v1062, 0.0
    %v1083 = vrot.slane %v1082, 4
    %v1084 = vadd.f32 %v1082, %v1083
    %v1085 = vrot.slane %v1084, 2
    %v1086 = vadd.f32 %v1084, %v1085
    %v1087 = vrot.slane %v1086, 1
    %v1088 = vadd.f32 %v1086, %v1087
    %v1089 = vsel %vm979, %v1063, 0.0
    %v1090 = vrot.slane %v1089, 4
    %v1091 = vadd.f32 %v1089, %v1090
    %v1092 = vrot.slane %v1091, 2
    %v1093 = vadd.f32 %v1091, %v1092
    %v1094 = vrot.slane %v1093, 1
    %v1095 = vadd.f32 %v1093, %v1094
    %v1096 = vsel %vm979, %v1064, 0.0
    %v1097 = vrot.slane %v1096, 4
    %v1098 = vadd.f32 %v1096, %v1097
    %v1099 = vrot.slane %v1098, 2
    %v1100 = vadd.f32 %v1098, %v1099
    %v1101 = vrot.slane %v1100, 1
    %v1102 = vadd.f32 %v1100, %v1101
    %v1103 = vsel %vm979, %v1065, 0.0
    %v1104 = vrot.slane %v1103, 4
    %v1105 = vadd.f32 %v1103, %v1104
    %v1106 = vrot.slane %v1105, 2
    %v1107 = vadd.f32 %v1105, %v1106
    %v1108 = vrot.slane %v1107, 1
    %v1109 = vadd.f32 %v1107, %v1108
    %v1110 = vsel %vm979, %v1066, 0.0
    %v1111 = vrot.slane %v1110, 4
    %v1112 = vadd.f32 %v1110, %v1111
    %v1113 = vrot.slane %v1112, 2
    %v1114 = vadd.f32 %v1112, %v1113
    %v1115 = vrot.slane %v1114, 1
    %v1116 = vadd.f32 %v1114, %v1115
    %v1117 = vsel %vm979, %v1067, 0.0
    %v1118 = vrot.slane %v1117, 4
    %v1119 = vadd.f32 %v1117, %v1118
    %v1120 = vrot.slane %v1119, 2
    %v1121 = vadd.f32 %v1119, %v1120
    %v1122 = vrot.slane %v1121, 1
    %v1123 = vadd.f32 %v1121, %v1122
    %v1124 = vlog2.pop %v1074
    %v1125 = vmul.f32 %v1124, 0.6931472
    %v1126 = vlog2.pop %v1081
    %v1127 = vmul.f32 %v1126, 0.6931472
    %v1128 = vlog2.pop %v1088
    %v1129 = vmul.f32 %v1128, 0.6931472
    %v1130 = vlog2.pop %v1095
    %v1131 = vmul.f32 %v1130, 0.6931472
    %v1132 = vlog2.pop %v1102
    %v1133 = vmul.f32 %v1132, 0.6931472
    %v1134 = vlog2.pop %v1109
    %v1135 = vmul.f32 %v1134, 0.6931472
    %v1136 = vlog2.pop %v1116
    %v1137 = vmul.f32 %v1136, 0.6931472
    %v1138 = vlog2.pop %v1123
    %v1139 = vmul.f32 %v1138, 0.6931472
    %v1140 = vsub.f32 %v1036, %v1125
    %v1141 = vsub.f32 %v1037, %v1127
    %v1142 = vsub.f32 %v1038, %v1129
    %v1143 = vsub.f32 %v1039, %v1131
    %v1144 = vsub.f32 %v1040, %v1133
    %v1145 = vsub.f32 %v1041, %v1135
    %v1146 = vsub.f32 %v1042, %v1137
    %v1147 = vsub.f32 %v1043, %v1139
    %1156 = vrot.lane.b32.xlu0 %v1140, 64
    %v1157 = vpop.permute.xlu0 %1156
    %1158 = vrot.lane.b32.xlu0 %v1141, 64
    %v1159 = vpop.permute.xlu0 %1158
    %1160 = vrot.lane.b32.xlu0 %v1142, 64
    %v1161 = vpop.permute.xlu0 %1160
    %1162 = vrot.lane.b32.xlu0 %v1143, 64
    %v1163 = vpop.permute.xlu0 %1162
    %1164 = vrot.lane.b32.xlu0 %v1144, 64
    %v1165 = vpop.permute.xlu0 %1164
    %1166 = vrot.lane.b32.xlu0 %v1145, 64
    %v1167 = vpop.permute.xlu0 %1166
    %1168 = vrot.lane.b32.xlu0 %v1146, 64
    %v1169 = vpop.permute.xlu0 %1168
    %1170 = vrot.lane.b32.xlu0 %v1147, 64
    %v1171 = vpop.permute.xlu0 %1170
    %1180 = vst.msk [vmem:[#allocation2] sm:$0xff] %vm169, %v1157
    %1181 = vst.msk [vmem:[#allocation2 + $0x8] sm:$0xff] %vm169, %v1159
    %1182 = vst.msk [vmem:[#allocation2 + $0x10] sm:$0xff] %vm169, %v1161
    %1183 = vst.msk [vmem:[#allocation2 + $0x18] sm:$0xff] %vm169, %v1163
    %1184 = vst.msk [vmem:[#allocation2 + $0x20] sm:$0xff] %vm169, %v1165
    %1185 = vst.msk [vmem:[#allocation2 + $0x28] sm:$0xff] %vm169, %v1167
    %1186 = vst.msk [vmem:[#allocation2 + $0x30] sm:$0xff] %vm169, %v1169
    %1187 = vst.msk [vmem:[#allocation2 + $0x38] sm:$0xff] %vm169, %v1171
    // Predicated region
    $region18: #{tpu_custom_call.1} parent=1 // pred_check
      _
    $region19: #{tpu_custom_call.1} parent=1 // pred_check_branch
      %1189 = sbr.rel (0) target = $region21
    $region20: #{tpu_custom_call.1} parent=1 // pred_region
      %s1191 = ssub.s32 1024, 1024
      %1192 = vsyncadd [#allocation3], %s1191
      %s1193 = sshll.u32 [#allocation2], 4
      %s1194 = int_to_ptr.vmem [resolvable:$true] %s1193
      %1199 = dma.vmem_to_hbm [thread:$0]  %s1194, 1024, %s4, [#allocation3], 128, 128, 8
    $region21: #{tpu_custom_call.1} parent=1 // pred_fallthru
      _
    // Predicated region
    $region22: #{tpu_custom_call.1} parent=1 // pred_check
      _
    $region23: #{tpu_custom_call.1} parent=1 // pred_check_branch
      %1201 = sbr.rel (0) target = $region25
    $region24: #{tpu_custom_call.1} parent=1 // pred_region
      %1202 = dma.done [#allocation3], 1024
    $region25: #{tpu_custom_call.1} parent=1 // pred_fallthru
      _
    %1203 = vsyncpa [#allocation3], 1

</llo_original>
